<compile_context>
chip_gen: v6e
topology: v6e:2x2x1
jax: 0.10.0
libtpu: 0.0.40
codegen_flags: <defaults>
</compile_context>

<pallas_src>
import numpy as np
import jax
import jax.numpy as jnp
from jax.experimental import pallas as pl
from jax.experimental.pallas import tpu as pltpu

LN_EPS = 1e-6
NORM_EPS = 1e-12
# clip(exp(log(1/0.07)), max=100) -> constant (non-learnable), computed host-side.
LOGIT_SCALE = float(min(np.exp(np.log(1.0 / 0.07)), 100.0))


def _round_up(n, m):
    return ((n + m - 1) // m) * m


def _cdiv(a, b):
    return -(-a // b)


def _vmem_capacity_bytes():
    try:
        return int(pltpu.get_tpu_info().vmem_capacity_bytes)
    except Exception:
        return 64 << 20  # conservative default (v7x per-TensorCore)


# --------------------------------- kernel -----------------------------------
def _linear_head_kernel(x_ref, gamma_ref, beta_ref, w_ref, o_ref):
    # ---- LayerNorm over E (f32 statistics) --------------------------------
    x = x_ref[...].astype(jnp.float32)            # (TB, E)
    gamma = gamma_ref[...].astype(jnp.float32)    # (1, E)
    beta = beta_ref[...].astype(jnp.float32)      # (1, E)

    mean = jnp.mean(x, axis=-1, keepdims=True)
    centered = x - mean
    var = jnp.mean(centered * centered, axis=-1, keepdims=True)
    rstd = jax.lax.rsqrt(var + LN_EPS)            # (TB, 1)
    xn = centered * (gamma * rstd) + beta         # (TB, E)

    # ---- Linear (no bias): MXU with narrow operands, f32 accumulate -------
    y = jnp.dot(xn.astype(w_ref.dtype), w_ref[...],
                preferred_element_type=jnp.float32)   # (TB, P_pad)

    # ---- L2 normalize + constant logit scale -------------------------------
    # F.normalize: y / max(||y||, eps)  ==  y * rsqrt(max(sum(y*y), eps^2)).
    # Single exact rsqrt (EUP), scale folded into the per-row inverse so only
    # one full-width multiply hits the VPU.
    sumsq = jnp.sum(y * y, axis=-1, keepdims=True)            # (TB, 1)
    inv = jax.lax.rsqrt(jnp.maximum(sumsq, NORM_EPS * NORM_EPS))
    o_ref[...] = (y * (LOGIT_SCALE * inv)).astype(o_ref.dtype)


# -------------------------------- wrapper -----------------------------------
def projection_head_forward(x, gamma, beta, w, *, tile_b=None,
                            matmul_dtype=jnp.bfloat16):
    """LinearHead forward.

    x: (B, E) float32; gamma/beta: (E,) LayerNorm affine; w: (E, P)
    (transpose of the PyTorch Linear weight).  Returns (B, P) in x.dtype.
    """
    B, E = x.shape
    P = w.shape[1]

    x_it = x.dtype.itemsize
    out_it = x.dtype.itemsize
    w_it = jnp.dtype(matmul_dtype).itemsize

    # Lane-dense output: pad projection dim to a multiple of 128 (skip the
    # HBM round trip entirely when already aligned).
    P_pad = _round_up(P, 128)

    # ---- generation-aware VMEM budget --------------------------------------
    capacity = _vmem_capacity_bytes()
    budget = int(0.78 * capacity)                 # headroom for Mosaic scratch
    max_tile = 1024 if capacity >= (96 << 20) else 512   # v5e/v6e vs v7x

    resident = E * P_pad * w_it + 2 * E * 4       # W (single-buffered) + gamma/beta
    # TODO(synk): add a K/N-tiled fallback (grid over E / P_pad with an f32
    # VMEM accumulator, reduction axis "arbitrary") for heads so large that
    # resident W exceeds ~1/3 of the v7x 64-MiB budget.

    # Per-row VMEM cost: double-buffered x/out streams + f32 body temporaries.
    per_row = 2 * E * x_it + 2 * P_pad * out_it + (2 * E + P_pad) * 4
    avail = budget - resident - (64 << 10)
    fit_tile = 8 if avail <= 0 else max(8, min((avail // per_row) // 8 * 8, max_tile))

    # ---- grid-aware tile_b --------------------------------------------------
    if tile_b is None:
        # >= ~4 grid steps when B allows it (pipeline overlap + megacore),
        # balanced so a ragged B does not double the padded work.
        min_steps = min(4, _cdiv(B, 8))
        steps = max(_cdiv(B, fit_tile), min_steps, 1)
        tile_b = _round_up(_cdiv(B, steps), 8)
    tile_b = max(8, min(_round_up(tile_b, 8), fit_tile))
    B_pad = _round_up(B, tile_b)

    # ---- wrapper-side data prep (avoid HBM round trips when possible) ------
    x_p = x if B_pad == B else jnp.pad(x, ((0, B_pad - B), (0, 0)))
    w_p = w.astype(matmul_dtype)
    if P_pad != P:
        w_p = jnp.pad(w_p, ((0, 0), (0, P_pad - P)))   # zero cols: L2-safe
    gamma2 = gamma.reshape(1, E)
    beta2 = beta.reshape(1, E)

    # ---- honest scoped-VMEM request -----------------------------------------
    stream = 2 * tile_b * E * x_it + 2 * tile_b * P_pad * out_it
    temps = tile_b * (2 * E + P_pad) * 4
    estimate = int(1.25 * (stream + temps + resident))
    vmem_limit = int(min(budget, max(estimate, 32 << 20)))

    cost = pl.CostEstimate(
        flops=2 * B_pad * E * P_pad + 8 * B_pad * E,
        transcendentals=2 * B_pad,
        bytes_accessed=B_pad * E * x_it + E * P_pad * w_it
                       + 2 * E * 4 + B_pad * P_pad * out_it,
    )

    grid = (B_pad // tile_b,)

    def _build(single_buffer_residents):
        res_kwargs = ({'pipeline_mode': pl.Buffered(1)}
                      if single_buffer_residents else {})
        in_specs = [
            pl.BlockSpec((tile_b, E), lambda i: (i, 0)),               # x: streamed
            pl.BlockSpec((1, E), lambda i: (0, 0), **res_kwargs),      # gamma: resident
            pl.BlockSpec((1, E), lambda i: (0, 0), **res_kwargs),      # beta: resident
            pl.BlockSpec((E, P_pad), lambda i: (0, 0), **res_kwargs),  # W: resident
        ]
        return pl.pallas_call(
            _linear_head_kernel,
            out_shape=jax.ShapeDtypeStruct((B_pad, P_pad), x.dtype),
            grid_spec=pl.GridSpec(
                grid=grid,
                in_specs=in_specs,
                out_specs=pl.BlockSpec((tile_b, P_pad), lambda i: (i, 0)),
            ),
            compiler_params=pltpu.CompilerParams(
                dimension_semantics=("parallel",),     # megacore-shardable batch
                vmem_limit_bytes=vmem_limit,
            ),
            cost_estimate=cost,
        )

    try:
        out = jax.block_until_ready(_build(True)(x_p, gamma2, beta2, w_p))
    except Exception:
        # Fallback: default (double-buffered) residents — identical numerics.
        out = _build(False)(x_p, gamma2, beta2, w_p)

    if B_pad == B and P_pad == P:
        return out
    return out[:B, :P]


# ------------------------------- references ---------------------------------
def _reference_f32(x, gamma, beta, w):
    mean = jnp.mean(x, axis=-1, keepdims=True)
    var = jnp.mean((x - mean) ** 2, axis=-1, keepdims=True)
    xn = (x - mean) * jax.lax.rsqrt(var + LN_EPS) * gamma + beta
    y = xn @ w
    n = jnp.maximum(jnp.linalg.norm(y, axis=-1, keepdims=True), NORM_EPS)
    return LOGIT_SCALE * y / n


def _reference_matched(x, gamma, beta, w, matmul_dtype=jnp.bfloat16):
    # Same math but with bf16 matmul operands, bounding kernel-specific error.
    mean = jnp.mean(x, axis=-1, keepdims=True)
    var = jnp.mean((x - mean) ** 2, axis=-1, keepdims=True)
    xn = (x - mean) * jax.lax.rsqrt(var + LN_EPS) * gamma + beta
    y = jnp.dot(xn.astype(matmul_dtype), w.astype(matmul_dtype),
                preferred_element_type=jnp.float32)
    n = jnp.maximum(jnp.linalg.norm(y, axis=-1, keepdims=True), NORM_EPS)
    return LOGIT_SCALE * y / n


if __name__ == "__main__":
    B, E, P = 16, 32, 16   # batch, embedding_dim, projection_dim (small test)

    key = jax.random.PRNGKey(0)
    kx, kw, kg, kb = jax.random.split(key, 4)

    x = jax.random.normal(kx, (B, E), dtype=jnp.float32)
    # Synthetic, deterministic parameters (non-trivial LayerNorm affine).
    gamma = 1.0 + 0.05 * jax.random.normal(kg, (E,), dtype=jnp.float32)
    beta = 0.05 * jax.random.normal(kb, (E,), dtype=jnp.float32)
    bound = 1.0 / float(np.sqrt(E))
    w = jax.random.uniform(kw, (E, P), dtype=jnp.float32,
                           minval=-bound, maxval=bound)

    # Auto tile_b -> 8-row tiles, 2 grid steps: exercises the pipelined grid.
    out = projection_head_forward(x, gamma, beta, w)
    out = jax.block_until_ready(out)
    assert out.shape == (B, P)

    # Tight check vs bf16-matched reference (only rsqrt/reassociation slack).
    np.testing.assert_allclose(np.asarray(out),
                               np.asarray(_reference_matched(x, gamma, beta, w)),
                               rtol=5e-3, atol=5e-2)
    # Looser check vs full-f32 reference (bf16 matmul operands in kernel).
    np.testing.assert_allclose(np.asarray(out),
                               np.asarray(_reference_f32(x, gamma, beta, w)),
                               rtol=2e-2, atol=1e-1)

    print("KERNEL_OK")
</pallas_src>

<mosaic_0001>
module attributes {stable_mosaic.version = 11 : i64} {
  func.func @_linear_head_kernel(%arg0: i32, %arg1: memref<8x32xf32, #tpu.memory_space<vmem>>, %arg2: memref<1x32xf32, #tpu.memory_space<vmem>>, %arg3: memref<1x32xf32, #tpu.memory_space<vmem>>, %arg4: memref<32x128xbf16, #tpu.memory_space<vmem>>, %arg5: memref<8x128xf32, #tpu.memory_space<vmem>>) attributes {dimension_semantics = [#tpu.dimension_semantics<parallel>], iteration_bounds = array<i64: 2>, scalar_prefetch = 0 : i64, scratch_operands = 0 : i64, tpu.core_type = #tpu.core_type<tc>, window_params = [{transform_indices = @transform_0, window_bounds = array<i64: 8, 32>}, {pipeline_mode = #tpu.pipeline_mode<synchronous>, transform_indices = @transform_1, window_bounds = array<i64: 1, 32>}, {pipeline_mode = #tpu.pipeline_mode<synchronous>, transform_indices = @transform_2, window_bounds = array<i64: 1, 32>}, {pipeline_mode = #tpu.pipeline_mode<synchronous>, transform_indices = @transform_3, window_bounds = array<i64: 32, 128>}, {transform_indices = @transform_4, window_bounds = array<i64: 8, 128>}]} {
    %c0 = arith.constant 0 : index
    %c0_0 = arith.constant 0 : index
    %0 = vector.load %arg1[%c0, %c0_0] : memref<8x32xf32, #tpu.memory_space<vmem>>, vector<8x32xf32>
    %c0_1 = arith.constant 0 : index
    %c0_2 = arith.constant 0 : index
    %1 = vector.load %arg2[%c0_1, %c0_2] : memref<1x32xf32, #tpu.memory_space<vmem>>, vector<1x32xf32>
    %c0_3 = arith.constant 0 : index
    %c0_4 = arith.constant 0 : index
    %2 = vector.load %arg3[%c0_3, %c0_4] : memref<1x32xf32, #tpu.memory_space<vmem>>, vector<1x32xf32>
    %cst = arith.constant dense<0.000000e+00> : vector<8xf32>
    %3 = vector.multi_reduction <add>, %0, %cst [1] : vector<8x32xf32> to vector<8xf32>
    %4 = vector.shape_cast %3 : vector<8xf32> to vector<8x1xf32>
    %cst_5 = arith.constant 3.200000e+01 : f32
    %5 = vector.broadcast %cst_5 : f32 to vector<8x1xf32>
    %6 = arith.divf %4, %5 : vector<8x1xf32>
    %7 = vector.broadcast %6 : vector<8x1xf32> to vector<8x32xf32>
    %8 = arith.subf %0, %7 : vector<8x32xf32>
    %9 = arith.mulf %8, %8 : vector<8x32xf32>
    %cst_6 = arith.constant dense<0.000000e+00> : vector<8xf32>
    %10 = vector.multi_reduction <add>, %9, %cst_6 [1] : vector<8x32xf32> to vector<8xf32>
    %11 = vector.shape_cast %10 : vector<8xf32> to vector<8x1xf32>
    %cst_7 = arith.constant 3.200000e+01 : f32
    %12 = vector.broadcast %cst_7 : f32 to vector<8x1xf32>
    %13 = arith.divf %11, %12 : vector<8x1xf32>
    %cst_8 = arith.constant 9.99999997E-7 : f32
    %14 = vector.broadcast %cst_8 : f32 to vector<8x1xf32>
    %15 = arith.addf %13, %14 : vector<8x1xf32>
    %16 = math.rsqrt %15 : vector<8x1xf32>
    %17 = vector.broadcast %1 : vector<1x32xf32> to vector<8x32xf32>
    %18 = vector.broadcast %16 : vector<8x1xf32> to vector<8x32xf32>
    %19 = arith.mulf %17, %18 : vector<8x32xf32>
    %20 = arith.mulf %8, %19 : vector<8x32xf32>
    %21 = vector.broadcast %2 : vector<1x32xf32> to vector<8x32xf32>
    %22 = arith.addf %20, %21 : vector<8x32xf32>
    %23 = arith.truncf %22 : vector<8x32xf32> to vector<8x32xbf16>
    %c0_9 = arith.constant 0 : index
    %c0_10 = arith.constant 0 : index
    %24 = vector.load %arg4[%c0_9, %c0_10] : memref<32x128xbf16, #tpu.memory_space<vmem>>, vector<32x128xbf16>
    %cst_11 = arith.constant dense<0.000000e+00> : vector<8x128xf32>
    %25 = tpu.matmul %23, %24, %cst_11 {dimension_numbers = #tpu.dot_dimension_numbers<[1], [0], [0], [1], [0, 0, 1, 1], [], []>} : vector<8x32xbf16>, vector<32x128xbf16>, vector<8x128xf32> -> vector<8x128xf32>
    %26 = arith.mulf %25, %25 : vector<8x128xf32>
    %cst_12 = arith.constant dense<0.000000e+00> : vector<8xf32>
    %27 = vector.multi_reduction <add>, %26, %cst_12 [1] : vector<8x128xf32> to vector<8xf32>
    %28 = vector.shape_cast %27 : vector<8xf32> to vector<8x1xf32>
    %cst_13 = arith.constant 1.000000e-24 : f32
    %29 = vector.broadcast %cst_13 : f32 to vector<8x1xf32>
    %30 = arith.maximumf %28, %29 : vector<8x1xf32>
    %31 = math.rsqrt %30 : vector<8x1xf32>
    %cst_14 = arith.constant 14.2857141 : f32
    %32 = vector.broadcast %cst_14 : f32 to vector<8x1xf32>
    %33 = arith.mulf %32, %31 : vector<8x1xf32>
    %34 = vector.broadcast %33 : vector<8x1xf32> to vector<8x128xf32>
    %35 = arith.mulf %25, %34 : vector<8x128xf32>
    %c0_15 = arith.constant 0 : index
    %c0_16 = arith.constant 0 : index
    %36 = vector.load %arg5[%c0_15, %c0_16] : memref<8x128xf32, #tpu.memory_space<vmem>>, vector<8x128xf32>
    tpu.vector_store %arg5[%c0_15, %c0_16], %35 {strides = array<i32>} : memref<8x128xf32, #tpu.memory_space<vmem>>, vector<8x128xf32>,
    return
  }
  func.func @transform_0(%arg0: i32) -> (i32, i32) {
    %c0_i32 = arith.constant 0 : i32
    %c0_i32_0 = arith.constant 0 : i32
    return %arg0, %c0_i32 : i32, i32
  }
  func.func @transform_1(%arg0: i32) -> (i32, i32) {
    %c0_i32 = arith.constant 0 : i32
    %c0_i32_0 = arith.constant 0 : i32
    %c0_i32_1 = arith.constant 0 : i32
    return %c0_i32, %c0_i32_0 : i32, i32
  }
  func.func @transform_2(%arg0: i32) -> (i32, i32) {
    %c0_i32 = arith.constant 0 : i32
    %c0_i32_0 = arith.constant 0 : i32
    %c0_i32_1 = arith.constant 0 : i32
    return %c0_i32, %c0_i32_0 : i32, i32
  }
  func.func @transform_3(%arg0: i32) -> (i32, i32) {
    %c0_i32 = arith.constant 0 : i32
    %c0_i32_0 = arith.constant 0 : i32
    %c0_i32_1 = arith.constant 0 : i32
    return %c0_i32, %c0_i32_0 : i32, i32
  }
  func.func @transform_4(%arg0: i32) -> (i32, i32) {
    %c0_i32 = arith.constant 0 : i32
    %c0_i32_0 = arith.constant 0 : i32
    return %arg0, %c0_i32 : i32, i32
  }
}

module attributes {stable_mosaic.version = 11 : i64} {
  func.func @_linear_head_kernel(%arg0: i32, %arg1: memref<8x32xf32, #tpu.memory_space<vmem>>, %arg2: memref<1x32xf32, #tpu.memory_space<vmem>>, %arg3: memref<1x32xf32, #tpu.memory_space<vmem>>, %arg4: memref<32x128xbf16, #tpu.memory_space<vmem>>, %arg5: memref<8x128xf32, #tpu.memory_space<vmem>>) attributes {dimension_semantics = [#tpu.dimension_semantics<parallel>], iteration_bounds = array<i64: 2>, scalar_prefetch = 0 : i64, scratch_operands = 0 : i64, tpu.core_type = #tpu.core_type<tc>, window_params = [{transform_indices = @transform_0, window_bounds = array<i64: 8, 32>}, {pipeline_mode = #tpu.pipeline_mode<synchronous>, transform_indices = @transform_1, window_bounds = array<i64: 1, 32>}, {pipeline_mode = #tpu.pipeline_mode<synchronous>, transform_indices = @transform_2, window_bounds = array<i64: 1, 32>}, {pipeline_mode = #tpu.pipeline_mode<synchronous>, transform_indices = @transform_3, window_bounds = array<i64: 32, 128>}, {transform_indices = @transform_4, window_bounds = array<i64: 8, 128>}]} {
    %c0 = arith.constant 0 : index
    %c0_0 = arith.constant 0 : index
    %0 = vector.load %arg1[%c0, %c0_0] : memref<8x32xf32, #tpu.memory_space<vmem>>, vector<8x32xf32>
    %c0_1 = arith.constant 0 : index
    %c0_2 = arith.constant 0 : index
    %1 = vector.load %arg2[%c0_1, %c0_2] : memref<1x32xf32, #tpu.memory_space<vmem>>, vector<1x32xf32>
    %c0_3 = arith.constant 0 : index
    %c0_4 = arith.constant 0 : index
    %2 = vector.load %arg3[%c0_3, %c0_4] : memref<1x32xf32, #tpu.memory_space<vmem>>, vector<1x32xf32>
    %cst = arith.constant dense<0.000000e+00> : vector<8xf32>
    %3 = vector.multi_reduction <add>, %0, %cst [1] : vector<8x32xf32> to vector<8xf32>
    %4 = vector.shape_cast %3 : vector<8xf32> to vector<8x1xf32>
    %cst_5 = arith.constant 3.200000e+01 : f32
    %5 = vector.broadcast %cst_5 : f32 to vector<8x1xf32>
    %6 = arith.divf %4, %5 : vector<8x1xf32>
    %7 = vector.broadcast %6 : vector<8x1xf32> to vector<8x32xf32>
    %8 = arith.subf %0, %7 : vector<8x32xf32>
    %9 = arith.mulf %8, %8 : vector<8x32xf32>
    %cst_6 = arith.constant dense<0.000000e+00> : vector<8xf32>
    %10 = vector.multi_reduction <add>, %9, %cst_6 [1] : vector<8x32xf32> to vector<8xf32>
    %11 = vector.shape_cast %10 : vector<8xf32> to vector<8x1xf32>
    %cst_7 = arith.constant 3.200000e+01 : f32
    %12 = vector.broadcast %cst_7 : f32 to vector<8x1xf32>
    %13 = arith.divf %11, %12 : vector<8x1xf32>
    %cst_8 = arith.constant 9.99999997E-7 : f32
    %14 = vector.broadcast %cst_8 : f32 to vector<8x1xf32>
    %15 = arith.addf %13, %14 : vector<8x1xf32>
    %16 = math.rsqrt %15 : vector<8x1xf32>
    %17 = vector.broadcast %1 : vector<1x32xf32> to vector<8x32xf32>
    %18 = vector.broadcast %16 : vector<8x1xf32> to vector<8x32xf32>
    %19 = arith.mulf %17, %18 : vector<8x32xf32>
    %20 = arith.mulf %8, %19 : vector<8x32xf32>
    %21 = vector.broadcast %2 : vector<1x32xf32> to vector<8x32xf32>
    %22 = arith.addf %20, %21 : vector<8x32xf32>
    %23 = arith.truncf %22 : vector<8x32xf32> to vector<8x32xbf16>
    %c0_9 = arith.constant 0 : index
    %c0_10 = arith.constant 0 : index
    %24 = vector.load %arg4[%c0_9, %c0_10] : memref<32x128xbf16, #tpu.memory_space<vmem>>, vector<32x128xbf16>
    %cst_11 = arith.constant dense<0.000000e+00> : vector<8x128xf32>
    %25 = tpu.matmul %23, %24, %cst_11 {dimension_numbers = #tpu.dot_dimension_numbers<[1], [0], [0], [1], [0, 0, 1, 1], [], []>} : vector<8x32xbf16>, vector<32x128xbf16>, vector<8x128xf32> -> vector<8x128xf32>
    %26 = arith.mulf %25, %25 : vector<8x128xf32>
    %cst_12 = arith.constant dense<0.000000e+00> : vector<8xf32>
    %27 = vector.multi_reduction <add>, %26, %cst_12 [1] : vector<8x128xf32> to vector<8xf32>
    %28 = vector.shape_cast %27 : vector<8xf32> to vector<8x1xf32>
    %cst_13 = arith.constant 1.000000e-24 : f32
    %29 = vector.broadcast %cst_13 : f32 to vector<8x1xf32>
    %30 = arith.maximumf %28, %29 : vector<8x1xf32>
    %31 = math.rsqrt %30 : vector<8x1xf32>
    %cst_14 = arith.constant 14.2857141 : f32
    %32 = vector.broadcast %cst_14 : f32 to vector<8x1xf32>
    %33 = arith.mulf %32, %31 : vector<8x1xf32>
    %34 = vector.broadcast %33 : vector<8x1xf32> to vector<8x128xf32>
    %35 = arith.mulf %25, %34 : vector<8x128xf32>
    %c0_15 = arith.constant 0 : index
    %c0_16 = arith.constant 0 : index
    %36 = vector.load %arg5[%c0_15, %c0_16] : memref<8x128xf32, #tpu.memory_space<vmem>>, vector<8x128xf32>
    tpu.vector_store %arg5[%c0_15, %c0_16], %35 {strides = array<i32>} : memref<8x128xf32, #tpu.memory_space<vmem>>, vector<8x128xf32>,
    return
  }
  func.func @transform_0(%arg0: i32) -> (i32, i32) {
    %c0_i32 = arith.constant 0 : i32
    %c0_i32_0 = arith.constant 0 : i32
    return %arg0, %c0_i32 : i32, i32
  }
  func.func @transform_1(%arg0: i32) -> (i32, i32) {
    %c0_i32 = arith.constant 0 : i32
    %c0_i32_0 = arith.constant 0 : i32
    %c0_i32_1 = arith.constant 0 : i32
    return %c0_i32, %c0_i32_0 : i32, i32
  }
  func.func @transform_2(%arg0: i32) -> (i32, i32) {
    %c0_i32 = arith.constant 0 : i32
    %c0_i32_0 = arith.constant 0 : i32
    %c0_i32_1 = arith.constant 0 : i32
    return %c0_i32, %c0_i32_0 : i32, i32
  }
  func.func @transform_3(%arg0: i32) -> (i32, i32) {
    %c0_i32 = arith.constant 0 : i32
    %c0_i32_0 = arith.constant 0 : i32
    %c0_i32_1 = arith.constant 0 : i32
    return %c0_i32, %c0_i32_0 : i32, i32
  }
  func.func @transform_4(%arg0: i32) -> (i32, i32) {
    %c0_i32 = arith.constant 0 : i32
    %c0_i32_0 = arith.constant 0 : i32
    return %arg0, %c0_i32 : i32, i32
  }
}

</mosaic_0001>

<llo_original>
// kernel: tpu_custom_call.1
$region0: #{tpu_custom_call.1}
  #allocation0 [shape = 'u32[]', space=smem, size = 0x4, offset = 0x4, fixed_abs, tag = 'smem constant byte address 0x4 - core index']
  #allocation1 [shape = 'u32[144,128]{1,0:T(1,128)}', space=vmem, size = 0x12000, scoped, tag = 'internal scratch']
  %s0 = inlined_call_operand.hbm [shape: f32[16,32], index: 0, kind: input, shape index: {}]
  %s1 = inlined_call_operand.vmem [shape: f32[1,32], index: 1, kind: input, shape index: {}]
  %s2 = inlined_call_operand.vmem [shape: f32[1,32], index: 2, kind: input, shape index: {}]
  %s3 = inlined_call_operand.hbm [shape: bf16[32,128], index: 3, kind: input, shape index: {}]
  %s4 = inlined_call_operand.hbm [shape: f32[16,128], index: 4, kind: output, shape index: {}]
  %s5 = sld [smem:[#allocation0]]
  $region57: #{tpu_custom_call.1} parent=0
    _
  %s7 = ssub.s32 1, %s5
  %s8 = scalar_select 0, %s7, %s5
  $region1: #{tpu_custom_call.1} parent=0
    #allocation2 [shape = 'u8[8192]{0}', space=vmem, size = 0x2000, scoped, tag = 'input window, operand 0']
    #allocation3 [shape = 's32[2]{0}', space=sflag, size = 0x8, scoped, tag = 'scoped memory for tpu_custom_call.1']
    #allocation4 [shape = 's32[2]{0}', space=sflag, size = 0x8, scoped, tag = 'scoped memory for tpu_custom_call.1']
    #allocation5 [shape = 'u8[8192]{0}', space=vmem, size = 0x2000, scoped, tag = 'input window, operand 3, single buffered']
    #allocation6 [shape = 's32[1]{0}', space=sflag, size = 0x4, scoped, tag = 'scoped memory for tpu_custom_call.1']
    #allocation7 [shape = 'u8[8192]{0}', space=vmem, size = 0x2000, scoped, tag = 'output window, operand 0']
    %9 = vsyncpa [#allocation3], 0
    %s10 = scalar_lea.sflag [#allocation3], 1
    %11 = vsyncpa %s10, 0
    %12 = vsyncpa [#allocation6], 0
    %13 = vsyncpa [#allocation4], 0
    %s14 = scalar_lea.sflag [#allocation4], 1
    %15 = vsyncpa %s14, 0
    loop: start=0, step=1, limit=4
    $region2: #{tpu_custom_call.1} parent=1 // loop_pre_header
      _
    $region3: #{tpu_custom_call.1} parent=1 // loop_header
      %s17 = sphi 0, %s21
      %p18 = scmp.ge.s32.totalorder %s17, 4
      %s27 = sphi 0, %s29
      %s30 = sphi 0, %s27
      %s31 = sphi 0, %s30
      %s47 = sphi 0, %s31
      %s51 = sphi 0, %s51
      %s53 = sphi 0, %s51
      %s54 = sphi 0, %s53
      %s68 = sphi 0, %s54
      %s72 = sphi 0, %s72
      %s74 = sphi 0, %s72
      %s75 = sphi 0, %s74
      %s89 = sphi 0, %s75
      %s93 = sphi 0, %s93
      %s95 = sphi 0, %s93
      %s96 = sphi 0, %s95
      %s110 = sphi 0, %s96
      %s116 = sphi 0, %s118
      %s119 = sphi 0, %s116
      %s120 = sphi 0, %s119
      %s136 = sphi 0, %s120
    $region4: #{tpu_custom_call.1} parent=1 // loop_header_branch
      %20 = sbr.rel (%p18) target = $region8
    $region5: #{tpu_custom_call.1} parent=1 // loop_body
      %s22 = ssub.s32 %s17, 1
      %s23 = ssub.s32 %s17, 2
      %s24 = sadd.s32 %s17, 1
      %s25 = ssub.s32 %s17, %s24
      %p26 = scmp.eq.s32.totalorder %s25, 0
      %s28 = sadd.s32 %s27, 1
      %s29 = scalar_select %p26, %s27, %s28
      %p32 = pneg %p26
      %p33 = scmp.eq.s32.totalorder %s17, 1
      %p34 = por %p32, %p33
      %p35 = scmp.ne.s32.totalorder %s27, %s30
      %p36 = scmp.eq.s32.totalorder %s17, 0
      %p37 = por %p35, %p36
      %p38 = scmp.ne.s32.totalorder %s27, %s30
      %p39 = scmp.eq.s32.totalorder %s22, 1
      %p40 = por %p38, %p39
      %p41 = scmp.ne.s32.totalorder %s30, %s31
      %p42 = scmp.eq.s32.totalorder %s22, 0
      %p43 = por %p41, %p42
      %p44 = scmp.ne.s32.totalorder %s30, %s31
      %p45 = scmp.eq.s32.totalorder %s23, 1
      %p46 = por %p44, %p45
      %p48 = scmp.ne.s32.totalorder %s31, %s47
      %p49 = scmp.eq.s32.totalorder %s23, 0
      %p50 = por %p48, %p49
      %s52 = sadd.s32 %s51, 1
      %p55 = scmp.eq.s32.totalorder %s17, 1
      %p56 = scmp.ne.s32.totalorder %s51, %s53
      %p57 = scmp.eq.s32.totalorder %s17, 0
      %p58 = por %p56, %p57
      %p59 = scmp.ne.s32.totalorder %s51, %s53
      %p60 = scmp.eq.s32.totalorder %s22, 1
      %p61 = por %p59, %p60
      %p62 = scmp.ne.s32.totalorder %s53, %s54
      %p63 = scmp.eq.s32.totalorder %s22, 0
      %p64 = por %p62, %p63
      %p65 = scmp.ne.s32.totalorder %s53, %s54
      %p66 = scmp.eq.s32.totalorder %s23, 1
      %p67 = por %p65, %p66
      %p69 = scmp.ne.s32.totalorder %s54, %s68
      %p70 = scmp.eq.s32.totalorder %s23, 0
      %p71 = por %p69, %p70
      %s73 = sadd.s32 %s72, 1
      %p76 = scmp.eq.s32.totalorder %s17, 1
      %p77 = scmp.ne.s32.totalorder %s72, %s74
      %p78 = scmp.eq.s32.totalorder %s17, 0
      %p79 = por %p77, %p78
      %p80 = scmp.ne.s32.totalorder %s72, %s74
      %p81 = scmp.eq.s32.totalorder %s22, 1
      %p82 = por %p80, %p81
      %p83 = scmp.ne.s32.totalorder %s74, %s75
      %p84 = scmp.eq.s32.totalorder %s22, 0
      %p85 = por %p83, %p84
      %p86 = scmp.ne.s32.totalorder %s74, %s75
      %p87 = scmp.eq.s32.totalorder %s23, 1
      %p88 = por %p86, %p87
      %p90 = scmp.ne.s32.totalorder %s75, %s89
      %p91 = scmp.eq.s32.totalorder %s23, 0
      %p92 = por %p90, %p91
      %s94 = sadd.s32 %s93, 1
      %p97 = scmp.eq.s32.totalorder %s17, 1
      %p98 = scmp.ne.s32.totalorder %s93, %s95
      %p99 = scmp.eq.s32.totalorder %s17, 0
      %p100 = por %p98, %p99
      %p101 = scmp.ne.s32.totalorder %s93, %s95
      %p102 = scmp.eq.s32.totalorder %s22, 1
      %p103 = por %p101, %p102
      %p104 = scmp.ne.s32.totalorder %s95, %s96
      %p105 = scmp.eq.s32.totalorder %s22, 0
      %p106 = por %p104, %p105
      %p107 = scmp.ne.s32.totalorder %s95, %s96
      %p108 = scmp.eq.s32.totalorder %s23, 1
      %p109 = por %p107, %p108
      %p111 = scmp.ne.s32.totalorder %s96, %s110
      %p112 = scmp.eq.s32.totalorder %s23, 0
      %p113 = por %p111, %p112
      %s114 = ssub.s32 %s17, %s24
      %p115 = scmp.eq.s32.totalorder %s114, 0
      %s117 = sadd.s32 %s116, 1
      %s118 = scalar_select %p115, %s116, %s117
      %p121 = pneg %p115
      %p122 = scmp.eq.s32.totalorder %s17, 1
      %p123 = por %p121, %p122
      %p124 = scmp.ne.s32.totalorder %s116, %s119
      %p125 = scmp.eq.s32.totalorder %s17, 0
      %p126 = por %p124, %p125
      %p127 = scmp.ne.s32.totalorder %s116, %s119
      %p128 = scmp.eq.s32.totalorder %s22, 1
      %p129 = por %p127, %p128
      %p130 = scmp.ne.s32.totalorder %s119, %s120
      %p131 = scmp.eq.s32.totalorder %s22, 0
      %p132 = por %p130, %p131
      %p133 = scmp.ne.s32.totalorder %s119, %s120
      %p134 = scmp.eq.s32.totalorder %s23, 1
      %p135 = por %p133, %p134
      %p137 = scmp.ne.s32.totalorder %s120, %s136
      %p138 = scmp.eq.s32.totalorder %s23, 0
      %p139 = por %p137, %p138
      %p140 = scmp.le.s32.totalorder 1, %s17
      %p141 = scmp.lt.s32.totalorder %s17, 3
      %p142 = pnand %p140, %p141
      %p143 = pneg %p142
      // Predicated region
      $region9: #{tpu_custom_call.1} parent=5 // pred_check
        _
      $region10: #{tpu_custom_call.1} parent=5 // pred_check_branch
        %145 = sbr.rel (%p142) target = $region12
      $region11: #{tpu_custom_call.1} parent=5 // pred_region
        %s146 = ssub.s32 %s17, 1
        // Predicated region
        $region13: #{tpu_custom_call.1} parent=11 // pred_check
          %p147 = pneg %p64
        $region14: #{tpu_custom_call.1} parent=11 // pred_check_branch
          %149 = sbr.rel (%p147) target = $region16
        $region15: #{tpu_custom_call.1} parent=11 // pred_region
          _
        $region16: #{tpu_custom_call.1} parent=11 // pred_fallthru
          _
        // Predicated region
        $region17: #{tpu_custom_call.1} parent=11 // pred_check
          %p150 = pneg %p85
        $region18: #{tpu_custom_call.1} parent=11 // pred_check_branch
          %152 = sbr.rel (%p150) target = $region20
        $region19: #{tpu_custom_call.1} parent=11 // pred_region
          _
        $region20: #{tpu_custom_call.1} parent=11 // pred_fallthru
          _
        // Predicated region
        $region21: #{tpu_custom_call.1} parent=11 // pred_check
          %p153 = pneg %p106
        $region22: #{tpu_custom_call.1} parent=11 // pred_check_branch
          %155 = sbr.rel (%p153) target = $region24
        $region23: #{tpu_custom_call.1} parent=11 // pred_region
          %s157 = ssub.s32 256, 256
          %158 = vsyncadd [#allocation6], %s157
          %s159 = sshll.u32 [#allocation5], 4
          %s160 = int_to_ptr.vmem [resolvable:$true] %s159
          %165 = dma.hbm_to_vmem [thread:$0]  %s3, 256, %s160, [#allocation6], 64, 64, 4
        $region24: #{tpu_custom_call.1} parent=11 // pred_fallthru
          _
      $region12: #{tpu_custom_call.1} parent=5 // pred_fallthru
        _
      %p166 = scmp.lt.s32.totalorder %s17, 2
      // Predicated region
      $region25: #{tpu_custom_call.1} parent=5 // pred_check
        %p167 = pneg %p166
      $region26: #{tpu_custom_call.1} parent=5 // pred_check_branch
        %169 = sbr.rel (%p167) target = $region28
      $region27: #{tpu_custom_call.1} parent=5 // pred_region
        // Predicated region
        $region29: #{tpu_custom_call.1} parent=27 // pred_check
          %p170 = pneg %p37
        $region30: #{tpu_custom_call.1} parent=27 // pred_check_branch
          %172 = sbr.rel (%p170) target = $region32
        $region31: #{tpu_custom_call.1} parent=27 // pred_region
          %s173 = sand.u32 %s27, 1
          %s174 = scalar_lea.sflag [#allocation3], %s173
          %s175 = sand.u32 %s27, 1
          %s176 = smul.addr %s175, 8
          %s177 = scalar_lea.vmem [#allocation2], %s176
          %s179 = ssub.s32 128, 128
          %180 = vsyncadd %s174, %s179
          %s181 = smul.addr %s17, 128
          %s182 = scalar_lea.hbm %s0, %s181
          %s184 = sshll.u32 %s177, 4
          %s185 = int_to_ptr.vmem [resolvable:$true] %s184
          %187 = dma.hbm_to_vmem [thread:$0]  %s182, 128, %s185, %s174
        $region32: #{tpu_custom_call.1} parent=27 // pred_fallthru
          _
      $region28: #{tpu_custom_call.1} parent=5 // pred_fallthru
        _
      %p188 = scmp.le.s32.totalorder 1, %s17
      %p189 = scmp.lt.s32.totalorder %s17, 3
      %p190 = pnand %p188, %p189
      %p191 = pneg %p190
      // Predicated region
      $region33: #{tpu_custom_call.1} parent=5 // pred_check
        _
      $region34: #{tpu_custom_call.1} parent=5 // pred_check_branch
        %193 = sbr.rel (%p190) target = $region36
      $region35: #{tpu_custom_call.1} parent=5 // pred_region
        %s194 = ssub.s32 %s17, 1
        %s195 = sand.u32 %s30, 1
        %s196 = scalar_lea.sflag [#allocation3], %s195
        %s197 = sand.u32 %s30, 1
        %s198 = smul.addr %s197, 8
        %s199 = scalar_lea.vmem [#allocation2], %s198
        // Predicated region
        $region37: #{tpu_custom_call.1} parent=35 // pred_check
          %p200 = pneg %p43
        $region38: #{tpu_custom_call.1} parent=35 // pred_check_branch
          %202 = sbr.rel (%p200) target = $region40
        $region39: #{tpu_custom_call.1} parent=35 // pred_region
          %203 = dma.done %s196, 128
        $region40: #{tpu_custom_call.1} parent=35 // pred_fallthru
          _
        // Predicated region
        $region41: #{tpu_custom_call.1} parent=35 // pred_check
          %p204 = pneg %p106
        $region42: #{tpu_custom_call.1} parent=35 // pred_check_branch
          %206 = sbr.rel (%p204) target = $region44
        $region43: #{tpu_custom_call.1} parent=35 // pred_region
          %207 = dma.done [#allocation6], 256
        $region44: #{tpu_custom_call.1} parent=35 // pred_fallthru
          _
        %s208 = sand.u32 %s30, 1
        %s209 = scalar_lea.sflag [#allocation3], %s208
        %s210 = sand.u32 %s30, 1
        %s211 = smul.addr %s210, 8
        %s212 = scalar_lea.vmem [#allocation2], %s211
        %p213 = pneg %p43
        %p214 = pneg %p40
        %p215 = pneg %p64
        %p216 = pneg %p61
        %p217 = pneg %p85
        %p218 = pneg %p82
        %p219 = pneg %p106
        %p220 = pneg %p103
        %p221 = pneg %p132
        %p222 = pneg %p129
        %s223 = sand.u32 %s119, 1
        %s224 = scalar_lea.sflag [#allocation4], %s223
        %s225 = sand.u32 %s119, 1
        %s226 = smul.addr %s225, 8
        %s227 = scalar_lea.vmem [#allocation7], %s226
        %v229 = vld [vmem:[%s199] sm:$0xff]
        %v230 = vld [vmem:[%s1] sm:$0x1]
        %v231 = vld [vmem:[%s2] sm:$0x1]
        %vm232 = vcmask 261120
        %v233 = vsel %vm232, %v229, 0.0
        %234 = vadd.xlane.f32.xlu0 %v233
        %v235 = vpop.xlane.xlu0 %234
        %v236 = vrcp.pop 32.0
        %v237 = vmul.f32 %v235, %v236
        %v238 = vsub.f32 %v229, %v237
        %v239 = vmul.f32 %v238, %v238
        %v240 = vsel %vm232, %v239, 0.0
        %241 = vadd.xlane.f32.xlu0 %v240
        %v242 = vpop.xlane.xlu0 %241
        %v243 = vmul.f32 %v242, %v236
        %v244 = vadd.f32 %v243, 1e-06
        %v245 = vrsqrt.pop %v244
        %v247 = vlaneseq
        %v248 = vshrl.u32 %v247, 7
        %v249 = vsub.s32 0, %v248
        %v250 = vrot.slane %v230, %v249
        %v252 = vmul.f32 %v250, %v245
        %v253 = vmul.f32 %v238, %v252
        %v255 = vlaneseq
        %v256 = vshrl.u32 %v255, 7
        %v257 = vsub.s32 0, %v256
        %v258 = vrot.slane %v231, %v257
        %v260 = vadd.f32 %v253, %v258
        %v261 = vpack.c.bf16 %v260, %v260
        %v262 = vld [vmem:[#allocation5] sm:$0xf]
        %v263 = vld [vmem:[#allocation5 + $0x4] sm:$0xf]
        %v264 = vld [vmem:[#allocation5 + $0x8] sm:$0xf]
        %v265 = vld [vmem:[#allocation5 + $0xc] sm:$0xf]
        %v270 = vunpack.c.l.b16 %v262
        %v271 = vunpack.c.l.b16 %v263
        %v272 = vunpack.c.l.b16 %v264
        %v273 = vunpack.c.l.b16 %v265
        %v274 = vpack.c.b16 %v271, %v270
        %v275 = vpack.c.b16 %v273, %v272
        %v279 = vsel %vm232, %v261, 0
        %281 = vmatprep.subr.bf16.mxu0 0
        %282 = vmatpush1.bf16.msra.mxu0 0
        %283 = vmatprep.subr.bf16.mxu0 0
        %284 = vmatpush1.bf16.msra.mxu0 0
        %285 = vmatprep.subr.bf16.mxu0 0
        %286 = vmatpush1.bf16.msra.mxu0 0
        %287 = vmatprep.subr.bf16.mxu0 0
        %288 = vmatpush1.bf16.msra.mxu0 0
        %289 = vmatprep.subr.bf16.mxu0 0
        %290 = vmatpush1.bf16.msra.mxu0 0
        %291 = vmatprep.subr.bf16.mxu0 0
        %292 = vmatpush1.bf16.msra.mxu0 0
        %293 = vmatprep.subr.bf16.mxu0 0
        %294 = vmatpush1.bf16.msra.mxu0 %v275
        %295 = vmatprep.subr.bf16.mxu0 0
        %296 = vmatpush1.bf16.msra.mxu0 %v274
        %297 = vmatprep.subr.bf16.mxu0 0
        %298 = vmatpush2.bf16.msra.mxu0 0
        %299 = vmatprep.subr.bf16.mxu0 0
        %300 = vmatpush2.bf16.msra.mxu0 0
        %301 = vmatprep.subr.bf16.mxu0 0
        %302 = vmatpush2.bf16.msra.mxu0 0
        %303 = vmatprep.subr.bf16.mxu0 0
        %304 = vmatpush2.bf16.msra.mxu0 0
        %305 = vmatprep.subr.bf16.mxu0 0
        %306 = vmatpush2.bf16.msra.mxu0 0
        %307 = vmatprep.subr.bf16.mxu0 0
        %308 = vmatpush2.bf16.msra.mxu0 0
        %309 = vmatprep.subr.bf16.mxu0 0
        %310 = vmatpush2.bf16.msra.mxu0 0
        %311 = vmatprep.subr.bf16.mxu0 0
        %312 = vmatpush2.bf16.msra.mxu0 0
        %313 = vmatprep.mubr.bf16.mxu0 0
        %314 = vmatmul.mubr.bf16.gmra.mxu0 %v279
        %v315 = vpop.f32.mrf.mxu0
        %v316 = vadd.f32 0.0, %v315
        %v317 = vpop.f32.mrf.mxu0
        %v318 = vpop.f32.mrf.mxu0
        %v319 = vpop.f32.mrf.mxu0
        %320 = vdwg.mxu0
        %v321 = vmul.f32 %v316, %v316
        %322 = vadd.xlane.f32.xlu0 %v321
        %v323 = vpop.xlane.xlu0 %322
        %v324 = vmax.f32 %v323, 1e-24
        %v325 = vrsqrt.pop %v324
        %v326 = vmul.f32 %v325, 14.285714
        %v327 = vmul.f32 %v316, %v326
        %328 = vst [vmem:[%s227] sm:$0xff] %v327
        %s329 = sand.u32 %s119, 1
        %s330 = scalar_lea.sflag [#allocation4], %s329
        %s331 = sand.u32 %s119, 1
        %s332 = smul.addr %s331, 8
        %s333 = scalar_lea.vmem [#allocation7], %s332
        // Predicated region
        $region45: #{tpu_custom_call.1} parent=35 // pred_check
          %p334 = pneg %p129
        $region46: #{tpu_custom_call.1} parent=35 // pred_check_branch
          %336 = sbr.rel (%p334) target = $region48
        $region47: #{tpu_custom_call.1} parent=35 // pred_region
          %s338 = ssub.s32 128, 128
          %339 = vsyncadd %s330, %s338
          %s340 = smul.addr %s22, 128
          %s341 = scalar_lea.hbm %s4, %s340
          %s343 = sshll.u32 %s333, 4
          %s344 = int_to_ptr.vmem [resolvable:$true] %s343
          %346 = dma.vmem_to_hbm [thread:$0]  %s344, 128, %s341, %s330
        $region48: #{tpu_custom_call.1} parent=35 // pred_fallthru
          _
      $region36: #{tpu_custom_call.1} parent=5 // pred_fallthru
        _
      %p347 = scmp.le.s32.totalorder 2, %s17
      // Predicated region
      $region49: #{tpu_custom_call.1} parent=5 // pred_check
        %p348 = pneg %p347
      $region50: #{tpu_custom_call.1} parent=5 // pred_check_branch
        %350 = sbr.rel (%p348) target = $region52
      $region51: #{tpu_custom_call.1} parent=5 // pred_region
        %s351 = ssub.s32 %s17, 2
        // Predicated region
        $region53: #{tpu_custom_call.1} parent=51 // pred_check
          %p352 = pneg %p135
        $region54: #{tpu_custom_call.1} parent=51 // pred_check_branch
          %354 = sbr.rel (%p352) target = $region56
        $region55: #{tpu_custom_call.1} parent=51 // pred_region
          %s355 = sand.u32 %s120, 1
          %s356 = scalar_lea.sflag [#allocation4], %s355
          %s357 = sand.u32 %s120, 1
          %s358 = smul.addr %s357, 8
          %s359 = scalar_lea.vmem [#allocation7], %s358
          %360 = dma.done %s356, 128
        $region56: #{tpu_custom_call.1} parent=51 // pred_fallthru
          _
      $region52: #{tpu_custom_call.1} parent=5 // pred_fallthru
        _
    $region6: #{tpu_custom_call.1} parent=1 // loop_footer
      %s21 = sadd.s32 1, %s17
    $region7: #{tpu_custom_call.1} parent=1 // loop_footer_branch
      %16 = sbr.rel target = $region3
    $region8: #{tpu_custom_call.1} parent=1 // loop_exit
      _
    %361 = vsyncpa [#allocation3], 1
    %s362 = scalar_lea.sflag [#allocation3], 1
    %363 = vsyncpa %s362, 1
    %364 = vsyncpa [#allocation6], 1
    %365 = vsyncpa [#allocation4], 1
    %s366 = scalar_lea.sflag [#allocation4], 1
    %367 = vsyncpa %s366, 1

// kernel: tpu_custom_call.1
$region0: #{tpu_custom_call.1}
  #allocation0 [shape = 'u32[]', space=smem, size = 0x4, offset = 0x4, fixed_abs, tag = 'smem constant byte address 0x4 - core index']
  #allocation1 [shape = 'u32[144,128]{1,0:T(1,128)}', space=vmem, size = 0x12000, scoped, tag = 'internal scratch']
  %s0 = inlined_call_operand.hbm [shape: f32[16,32], index: 0, kind: input, shape index: {}]
  %s1 = inlined_call_operand.vmem [shape: f32[1,32], index: 1, kind: input, shape index: {}]
  %s2 = inlined_call_operand.vmem [shape: f32[1,32], index: 2, kind: input, shape index: {}]
  %s3 = inlined_call_operand.hbm [shape: bf16[32,128], index: 3, kind: input, shape index: {}]
  %s4 = inlined_call_operand.hbm [shape: f32[16,128], index: 4, kind: output, shape index: {}]
  %s5 = sld [smem:[#allocation0]]
  $region57: #{tpu_custom_call.1} parent=0
    _
  %s7 = ssub.s32 1, %s5
  %s8 = scalar_select 0, %s7, %s5
  $region1: #{tpu_custom_call.1} parent=0
    #allocation2 [shape = 'u8[8192]{0}', space=vmem, size = 0x2000, scoped, tag = 'input window, operand 0']
    #allocation3 [shape = 's32[2]{0}', space=sflag, size = 0x8, scoped, tag = 'scoped memory for tpu_custom_call.1']
    #allocation4 [shape = 's32[2]{0}', space=sflag, size = 0x8, scoped, tag = 'scoped memory for tpu_custom_call.1']
    #allocation5 [shape = 'u8[8192]{0}', space=vmem, size = 0x2000, scoped, tag = 'input window, operand 3, single buffered']
    #allocation6 [shape = 's32[1]{0}', space=sflag, size = 0x4, scoped, tag = 'scoped memory for tpu_custom_call.1']
    #allocation7 [shape = 'u8[8192]{0}', space=vmem, size = 0x2000, scoped, tag = 'output window, operand 0']
    %9 = vsyncpa [#allocation3], 0
    %s10 = scalar_lea.sflag [#allocation3], 1
    %11 = vsyncpa %s10, 0
    %12 = vsyncpa [#allocation6], 0
    %13 = vsyncpa [#allocation4], 0
    %s14 = scalar_lea.sflag [#allocation4], 1
    %15 = vsyncpa %s14, 0
    loop: start=0, step=1, limit=4
    $region2: #{tpu_custom_call.1} parent=1 // loop_pre_header
      _
    $region3: #{tpu_custom_call.1} parent=1 // loop_header
      %s17 = sphi 0, %s21
      %p18 = scmp.ge.s32.totalorder %s17, 4
      %s27 = sphi 0, %s29
      %s30 = sphi 0, %s27
      %s31 = sphi 0, %s30
      %s47 = sphi 0, %s31
      %s51 = sphi 0, %s51
      %s53 = sphi 0, %s51
      %s54 = sphi 0, %s53
      %s68 = sphi 0, %s54
      %s72 = sphi 0, %s72
      %s74 = sphi 0, %s72
      %s75 = sphi 0, %s74
      %s89 = sphi 0, %s75
      %s93 = sphi 0, %s93
      %s95 = sphi 0, %s93
      %s96 = sphi 0, %s95
      %s110 = sphi 0, %s96
      %s116 = sphi 0, %s118
      %s119 = sphi 0, %s116
      %s120 = sphi 0, %s119
      %s136 = sphi 0, %s120
    $region4: #{tpu_custom_call.1} parent=1 // loop_header_branch
      %20 = sbr.rel (%p18) target = $region8
    $region5: #{tpu_custom_call.1} parent=1 // loop_body
      %s22 = ssub.s32 %s17, 1
      %s23 = ssub.s32 %s17, 2
      %s24 = sadd.s32 %s17, 1
      %s25 = ssub.s32 %s17, %s24
      %p26 = scmp.eq.s32.totalorder %s25, 0
      %s28 = sadd.s32 %s27, 1
      %s29 = scalar_select %p26, %s27, %s28
      %p32 = pneg %p26
      %p33 = scmp.eq.s32.totalorder %s17, 1
      %p34 = por %p32, %p33
      %p35 = scmp.ne.s32.totalorder %s27, %s30
      %p36 = scmp.eq.s32.totalorder %s17, 0
      %p37 = por %p35, %p36
      %p38 = scmp.ne.s32.totalorder %s27, %s30
      %p39 = scmp.eq.s32.totalorder %s22, 1
      %p40 = por %p38, %p39
      %p41 = scmp.ne.s32.totalorder %s30, %s31
      %p42 = scmp.eq.s32.totalorder %s22, 0
      %p43 = por %p41, %p42
      %p44 = scmp.ne.s32.totalorder %s30, %s31
      %p45 = scmp.eq.s32.totalorder %s23, 1
      %p46 = por %p44, %p45
      %p48 = scmp.ne.s32.totalorder %s31, %s47
      %p49 = scmp.eq.s32.totalorder %s23, 0
      %p50 = por %p48, %p49
      %s52 = sadd.s32 %s51, 1
      %p55 = scmp.eq.s32.totalorder %s17, 1
      %p56 = scmp.ne.s32.totalorder %s51, %s53
      %p57 = scmp.eq.s32.totalorder %s17, 0
      %p58 = por %p56, %p57
      %p59 = scmp.ne.s32.totalorder %s51, %s53
      %p60 = scmp.eq.s32.totalorder %s22, 1
      %p61 = por %p59, %p60
      %p62 = scmp.ne.s32.totalorder %s53, %s54
      %p63 = scmp.eq.s32.totalorder %s22, 0
      %p64 = por %p62, %p63
      %p65 = scmp.ne.s32.totalorder %s53, %s54
      %p66 = scmp.eq.s32.totalorder %s23, 1
      %p67 = por %p65, %p66
      %p69 = scmp.ne.s32.totalorder %s54, %s68
      %p70 = scmp.eq.s32.totalorder %s23, 0
      %p71 = por %p69, %p70
      %s73 = sadd.s32 %s72, 1
      %p76 = scmp.eq.s32.totalorder %s17, 1
      %p77 = scmp.ne.s32.totalorder %s72, %s74
      %p78 = scmp.eq.s32.totalorder %s17, 0
      %p79 = por %p77, %p78
      %p80 = scmp.ne.s32.totalorder %s72, %s74
      %p81 = scmp.eq.s32.totalorder %s22, 1
      %p82 = por %p80, %p81
      %p83 = scmp.ne.s32.totalorder %s74, %s75
      %p84 = scmp.eq.s32.totalorder %s22, 0
      %p85 = por %p83, %p84
      %p86 = scmp.ne.s32.totalorder %s74, %s75
      %p87 = scmp.eq.s32.totalorder %s23, 1
      %p88 = por %p86, %p87
      %p90 = scmp.ne.s32.totalorder %s75, %s89
      %p91 = scmp.eq.s32.totalorder %s23, 0
      %p92 = por %p90, %p91
      %s94 = sadd.s32 %s93, 1
      %p97 = scmp.eq.s32.totalorder %s17, 1
      %p98 = scmp.ne.s32.totalorder %s93, %s95
      %p99 = scmp.eq.s32.totalorder %s17, 0
      %p100 = por %p98, %p99
      %p101 = scmp.ne.s32.totalorder %s93, %s95
      %p102 = scmp.eq.s32.totalorder %s22, 1
      %p103 = por %p101, %p102
      %p104 = scmp.ne.s32.totalorder %s95, %s96
      %p105 = scmp.eq.s32.totalorder %s22, 0
      %p106 = por %p104, %p105
      %p107 = scmp.ne.s32.totalorder %s95, %s96
      %p108 = scmp.eq.s32.totalorder %s23, 1
      %p109 = por %p107, %p108
      %p111 = scmp.ne.s32.totalorder %s96, %s110
      %p112 = scmp.eq.s32.totalorder %s23, 0
      %p113 = por %p111, %p112
      %s114 = ssub.s32 %s17, %s24
      %p115 = scmp.eq.s32.totalorder %s114, 0
      %s117 = sadd.s32 %s116, 1
      %s118 = scalar_select %p115, %s116, %s117
      %p121 = pneg %p115
      %p122 = scmp.eq.s32.totalorder %s17, 1
      %p123 = por %p121, %p122
      %p124 = scmp.ne.s32.totalorder %s116, %s119
      %p125 = scmp.eq.s32.totalorder %s17, 0
      %p126 = por %p124, %p125
      %p127 = scmp.ne.s32.totalorder %s116, %s119
      %p128 = scmp.eq.s32.totalorder %s22, 1
      %p129 = por %p127, %p128
      %p130 = scmp.ne.s32.totalorder %s119, %s120
      %p131 = scmp.eq.s32.totalorder %s22, 0
      %p132 = por %p130, %p131
      %p133 = scmp.ne.s32.totalorder %s119, %s120
      %p134 = scmp.eq.s32.totalorder %s23, 1
      %p135 = por %p133, %p134
      %p137 = scmp.ne.s32.totalorder %s120, %s136
      %p138 = scmp.eq.s32.totalorder %s23, 0
      %p139 = por %p137, %p138
      %p140 = scmp.le.s32.totalorder 1, %s17
      %p141 = scmp.lt.s32.totalorder %s17, 3
      %p142 = pnand %p140, %p141
      %p143 = pneg %p142
      // Predicated region
      $region9: #{tpu_custom_call.1} parent=5 // pred_check
        _
      $region10: #{tpu_custom_call.1} parent=5 // pred_check_branch
        %145 = sbr.rel (%p142) target = $region12
      $region11: #{tpu_custom_call.1} parent=5 // pred_region
        %s146 = ssub.s32 %s17, 1
        // Predicated region
        $region13: #{tpu_custom_call.1} parent=11 // pred_check
          %p147 = pneg %p64
        $region14: #{tpu_custom_call.1} parent=11 // pred_check_branch
          %149 = sbr.rel (%p147) target = $region16
        $region15: #{tpu_custom_call.1} parent=11 // pred_region
          _
        $region16: #{tpu_custom_call.1} parent=11 // pred_fallthru
          _
        // Predicated region
        $region17: #{tpu_custom_call.1} parent=11 // pred_check
          %p150 = pneg %p85
        $region18: #{tpu_custom_call.1} parent=11 // pred_check_branch
          %152 = sbr.rel (%p150) target = $region20
        $region19: #{tpu_custom_call.1} parent=11 // pred_region
          _
        $region20: #{tpu_custom_call.1} parent=11 // pred_fallthru
          _
        // Predicated region
        $region21: #{tpu_custom_call.1} parent=11 // pred_check
          %p153 = pneg %p106
        $region22: #{tpu_custom_call.1} parent=11 // pred_check_branch
          %155 = sbr.rel (%p153) target = $region24
        $region23: #{tpu_custom_call.1} parent=11 // pred_region
          %s157 = ssub.s32 256, 256
          %158 = vsyncadd [#allocation6], %s157
          %s159 = sshll.u32 [#allocation5], 4
          %s160 = int_to_ptr.vmem [resolvable:$true] %s159
          %165 = dma.hbm_to_vmem [thread:$0]  %s3, 256, %s160, [#allocation6], 64, 64, 4
        $region24: #{tpu_custom_call.1} parent=11 // pred_fallthru
          _
      $region12: #{tpu_custom_call.1} parent=5 // pred_fallthru
        _
      %p166 = scmp.lt.s32.totalorder %s17, 2
      // Predicated region
      $region25: #{tpu_custom_call.1} parent=5 // pred_check
        %p167 = pneg %p166
      $region26: #{tpu_custom_call.1} parent=5 // pred_check_branch
        %169 = sbr.rel (%p167) target = $region28
      $region27: #{tpu_custom_call.1} parent=5 // pred_region
        // Predicated region
        $region29: #{tpu_custom_call.1} parent=27 // pred_check
          %p170 = pneg %p37
        $region30: #{tpu_custom_call.1} parent=27 // pred_check_branch
          %172 = sbr.rel (%p170) target = $region32
        $region31: #{tpu_custom_call.1} parent=27 // pred_region
          %s173 = sand.u32 %s27, 1
          %s174 = scalar_lea.sflag [#allocation3], %s173
          %s175 = sand.u32 %s27, 1
          %s176 = smul.addr %s175, 8
          %s177 = scalar_lea.vmem [#allocation2], %s176
          %s179 = ssub.s32 128, 128
          %180 = vsyncadd %s174, %s179
          %s181 = smul.addr %s17, 128
          %s182 = scalar_lea.hbm %s0, %s181
          %s184 = sshll.u32 %s177, 4
          %s185 = int_to_ptr.vmem [resolvable:$true] %s184
          %187 = dma.hbm_to_vmem [thread:$0]  %s182, 128, %s185, %s174
        $region32: #{tpu_custom_call.1} parent=27 // pred_fallthru
          _
      $region28: #{tpu_custom_call.1} parent=5 // pred_fallthru
        _
      %p188 = scmp.le.s32.totalorder 1, %s17
      %p189 = scmp.lt.s32.totalorder %s17, 3
      %p190 = pnand %p188, %p189
      %p191 = pneg %p190
      // Predicated region
      $region33: #{tpu_custom_call.1} parent=5 // pred_check
        _
      $region34: #{tpu_custom_call.1} parent=5 // pred_check_branch
        %193 = sbr.rel (%p190) target = $region36
      $region35: #{tpu_custom_call.1} parent=5 // pred_region
        %s194 = ssub.s32 %s17, 1
        %s195 = sand.u32 %s30, 1
        %s196 = scalar_lea.sflag [#allocation3], %s195
        %s197 = sand.u32 %s30, 1
        %s198 = smul.addr %s197, 8
        %s199 = scalar_lea.vmem [#allocation2], %s198
        // Predicated region
        $region37: #{tpu_custom_call.1} parent=35 // pred_check
          %p200 = pneg %p43
        $region38: #{tpu_custom_call.1} parent=35 // pred_check_branch
          %202 = sbr.rel (%p200) target = $region40
        $region39: #{tpu_custom_call.1} parent=35 // pred_region
          %203 = dma.done %s196, 128
        $region40: #{tpu_custom_call.1} parent=35 // pred_fallthru
          _
        // Predicated region
        $region41: #{tpu_custom_call.1} parent=35 // pred_check
          %p204 = pneg %p106
        $region42: #{tpu_custom_call.1} parent=35 // pred_check_branch
          %206 = sbr.rel (%p204) target = $region44
        $region43: #{tpu_custom_call.1} parent=35 // pred_region
          %207 = dma.done [#allocation6], 256
        $region44: #{tpu_custom_call.1} parent=35 // pred_fallthru
          _
        %s208 = sand.u32 %s30, 1
        %s209 = scalar_lea.sflag [#allocation3], %s208
        %s210 = sand.u32 %s30, 1
        %s211 = smul.addr %s210, 8
        %s212 = scalar_lea.vmem [#allocation2], %s211
        %p213 = pneg %p43
        %p214 = pneg %p40
        %p215 = pneg %p64
        %p216 = pneg %p61
        %p217 = pneg %p85
        %p218 = pneg %p82
        %p219 = pneg %p106
        %p220 = pneg %p103
        %p221 = pneg %p132
        %p222 = pneg %p129
        %s223 = sand.u32 %s119, 1
        %s224 = scalar_lea.sflag [#allocation4], %s223
        %s225 = sand.u32 %s119, 1
        %s226 = smul.addr %s225, 8
        %s227 = scalar_lea.vmem [#allocation7], %s226
        %v229 = vld [vmem:[%s199] sm:$0xff]
        %v230 = vld [vmem:[%s1] sm:$0x1]
        %v231 = vld [vmem:[%s2] sm:$0x1]
        %vm232 = vcmask 261120
        %v233 = vsel %vm232, %v229, 0.0
        %234 = vadd.xlane.f32.xlu0 %v233
        %v235 = vpop.xlane.xlu0 %234
        %v236 = vrcp.pop 32.0
        %v237 = vmul.f32 %v235, %v236
        %v238 = vsub.f32 %v229, %v237
        %v239 = vmul.f32 %v238, %v238
        %v240 = vsel %vm232, %v239, 0.0
        %241 = vadd.xlane.f32.xlu0 %v240
        %v242 = vpop.xlane.xlu0 %241
        %v243 = vmul.f32 %v242, %v236
        %v244 = vadd.f32 %v243, 1e-06
        %v245 = vrsqrt.pop %v244
        %v247 = vlaneseq
        %v248 = vshrl.u32 %v247, 7
        %v249 = vsub.s32 0, %v248
        %v250 = vrot.slane %v230, %v249
        %v252 = vmul.f32 %v250, %v245
        %v253 = vmul.f32 %v238, %v252
        %v255 = vlaneseq
        %v256 = vshrl.u32 %v255, 7
        %v257 = vsub.s32 0, %v256
        %v258 = vrot.slane %v231, %v257
        %v260 = vadd.f32 %v253, %v258
        %v261 = vpack.c.bf16 %v260, %v260
        %v262 = vld [vmem:[#allocation5] sm:$0xf]
        %v263 = vld [vmem:[#allocation5 + $0x4] sm:$0xf]
        %v264 = vld [vmem:[#allocation5 + $0x8] sm:$0xf]
        %v265 = vld [vmem:[#allocation5 + $0xc] sm:$0xf]
        %v270 = vunpack.c.l.b16 %v262
        %v271 = vunpack.c.l.b16 %v263
        %v272 = vunpack.c.l.b16 %v264
        %v273 = vunpack.c.l.b16 %v265
        %v274 = vpack.c.b16 %v271, %v270
        %v275 = vpack.c.b16 %v273, %v272
        %v279 = vsel %vm232, %v261, 0
        %281 = vmatprep.subr.bf16.mxu0 0
        %282 = vmatpush1.bf16.msra.mxu0 0
        %283 = vmatprep.subr.bf16.mxu0 0
        %284 = vmatpush1.bf16.msra.mxu0 0
        %285 = vmatprep.subr.bf16.mxu0 0
        %286 = vmatpush1.bf16.msra.mxu0 0
        %287 = vmatprep.subr.bf16.mxu0 0
        %288 = vmatpush1.bf16.msra.mxu0 0
        %289 = vmatprep.subr.bf16.mxu0 0
        %290 = vmatpush1.bf16.msra.mxu0 0
        %291 = vmatprep.subr.bf16.mxu0 0
        %292 = vmatpush1.bf16.msra.mxu0 0
        %293 = vmatprep.subr.bf16.mxu0 0
        %294 = vmatpush1.bf16.msra.mxu0 %v275
        %295 = vmatprep.subr.bf16.mxu0 0
        %296 = vmatpush1.bf16.msra.mxu0 %v274
        %297 = vmatprep.subr.bf16.mxu0 0
        %298 = vmatpush2.bf16.msra.mxu0 0
        %299 = vmatprep.subr.bf16.mxu0 0
        %300 = vmatpush2.bf16.msra.mxu0 0
        %301 = vmatprep.subr.bf16.mxu0 0
        %302 = vmatpush2.bf16.msra.mxu0 0
        %303 = vmatprep.subr.bf16.mxu0 0
        %304 = vmatpush2.bf16.msra.mxu0 0
        %305 = vmatprep.subr.bf16.mxu0 0
        %306 = vmatpush2.bf16.msra.mxu0 0
        %307 = vmatprep.subr.bf16.mxu0 0
        %308 = vmatpush2.bf16.msra.mxu0 0
        %309 = vmatprep.subr.bf16.mxu0 0
        %310 = vmatpush2.bf16.msra.mxu0 0
        %311 = vmatprep.subr.bf16.mxu0 0
        %312 = vmatpush2.bf16.msra.mxu0 0
        %313 = vmatprep.mubr.bf16.mxu0 0
        %314 = vmatmul.mubr.bf16.gmra.mxu0 %v279
        %v315 = vpop.f32.mrf.mxu0
        %v316 = vadd.f32 0.0, %v315
        %v317 = vpop.f32.mrf.mxu0
        %v318 = vpop.f32.mrf.mxu0
        %v319 = vpop.f32.mrf.mxu0
        %320 = vdwg.mxu0
        %v321 = vmul.f32 %v316, %v316
        %322 = vadd.xlane.f32.xlu0 %v321
        %v323 = vpop.xlane.xlu0 %322
        %v324 = vmax.f32 %v323, 1e-24
        %v325 = vrsqrt.pop %v324
        %v326 = vmul.f32 %v325, 14.285714
        %v327 = vmul.f32 %v316, %v326
        %328 = vst [vmem:[%s227] sm:$0xff] %v327
        %s329 = sand.u32 %s119, 1
        %s330 = scalar_lea.sflag [#allocation4], %s329
        %s331 = sand.u32 %s119, 1
        %s332 = smul.addr %s331, 8
        %s333 = scalar_lea.vmem [#allocation7], %s332
        // Predicated region
        $region45: #{tpu_custom_call.1} parent=35 // pred_check
          %p334 = pneg %p129
        $region46: #{tpu_custom_call.1} parent=35 // pred_check_branch
          %336 = sbr.rel (%p334) target = $region48
        $region47: #{tpu_custom_call.1} parent=35 // pred_region
          %s338 = ssub.s32 128, 128
          %339 = vsyncadd %s330, %s338
          %s340 = smul.addr %s22, 128
          %s341 = scalar_lea.hbm %s4, %s340
          %s343 = sshll.u32 %s333, 4
          %s344 = int_to_ptr.vmem [resolvable:$true] %s343
          %346 = dma.vmem_to_hbm [thread:$0]  %s344, 128, %s341, %s330
        $region48: #{tpu_custom_call.1} parent=35 // pred_fallthru
          _
      $region36: #{tpu_custom_call.1} parent=5 // pred_fallthru
        _
      %p347 = scmp.le.s32.totalorder 2, %s17
      // Predicated region
      $region49: #{tpu_custom_call.1} parent=5 // pred_check
        %p348 = pneg %p347
      $region50: #{tpu_custom_call.1} parent=5 // pred_check_branch
        %350 = sbr.rel (%p348) target = $region52
      $region51: #{tpu_custom_call.1} parent=5 // pred_region
        %s351 = ssub.s32 %s17, 2
        // Predicated region
        $region53: #{tpu_custom_call.1} parent=51 // pred_check
          %p352 = pneg %p135
        $region54: #{tpu_custom_call.1} parent=51 // pred_check_branch
          %354 = sbr.rel (%p352) target = $region56
        $region55: #{tpu_custom_call.1} parent=51 // pred_region
          %s355 = sand.u32 %s120, 1
          %s356 = scalar_lea.sflag [#allocation4], %s355
          %s357 = sand.u32 %s120, 1
          %s358 = smul.addr %s357, 8
          %s359 = scalar_lea.vmem [#allocation7], %s358
          %360 = dma.done %s356, 128
        $region56: #{tpu_custom_call.1} parent=51 // pred_fallthru
          _
      $region52: #{tpu_custom_call.1} parent=5 // pred_fallthru
        _
    $region6: #{tpu_custom_call.1} parent=1 // loop_footer
      %s21 = sadd.s32 1, %s17
    $region7: #{tpu_custom_call.1} parent=1 // loop_footer_branch
      %16 = sbr.rel target = $region3
    $region8: #{tpu_custom_call.1} parent=1 // loop_exit
      _
    %361 = vsyncpa [#allocation3], 1
    %s362 = scalar_lea.sflag [#allocation3], 1
    %363 = vsyncpa %s362, 1
    %364 = vsyncpa [#allocation6], 1
    %365 = vsyncpa [#allocation4], 1
    %s366 = scalar_lea.sflag [#allocation4], 1
    %367 = vsyncpa %s366, 1

</llo_original>
